<compile_context>
chip_gen: v7x
topology: tpu7x:2x2x1
jax: 0.10.0
libtpu: 0.0.40
codegen_flags: <defaults>
</compile_context>

<pallas_src>
import functools

import numpy as np

import jax
import jax.numpy as jnp
from jax.experimental import pallas as pl
from jax.experimental.pallas import tpu as pltpu


# ----------------------------------------------------------------------------
# Host-side, one-time weight packing: (3, 3, Cin, Cout) HWIO ->
# (3, W*Cin, W*Cout) banded matrices so that a lane-packed image row
# (lane = w*Cin + ci) is convolved width-wise by a single MXU matmul per
# height tap.  Out-of-range (w+dx-1) columns are absent => width zero-pad.
# ----------------------------------------------------------------------------
def _pack_banded_weights(w_hwio, width):
    kh, kw, cin, cout = w_hwio.shape
    assert (kh, kw) == (3, 3)
    w_np = np.asarray(w_hwio, dtype=np.float32)
    wb = np.zeros((3, width * cin, width * cout), np.float32)
    for dy in range(3):
        for dx in range(3):
            for wi in range(width):
                src = wi + dx - 1
                if 0 <= src < width:
                    wb[dy, src * cin:(src + 1) * cin,
                       wi * cout:(wi + 1) * cout] = w_np[dy, dx]
    return wb


# ----------------------------------------------------------------------------
# In-kernel helpers.
# ----------------------------------------------------------------------------
def _temporal_shift(left, center, right, C):
    """Channel-fold temporal shift on lane-packed (rows, W*C) (lane = w*C+c)."""
    L = center.shape[-1]
    ch = jax.lax.broadcasted_iota(jnp.int32, (1, L), 1) % C
    fold = C // 8
    return jnp.where(ch < fold, right,
                     jnp.where(ch < 2 * fold, left, center))


def _conv3x3_rows(x_rows, w_ref, b_ref, H):
    """3x3 conv, stride 1, pad 1 on a stack of N frames of lane-packed rows.

    x_rows: (N*H, W*Cin) value (MXU dtype), w_ref: (3, W*Cin, W*Cout) banded
    weights, b_ref: (1, W*Cout) f32 lane-tiled bias.  Returns f32
    (N*H, W*Cout).  Height padding is applied to the f32 partial products
    (row shift + frame-boundary masking), so the MXU operand is used as-is
    for all three taps (no per-tap slice or cast).
    """
    R = x_rows.shape[0]
    L_out = w_ref.shape[-1]
    # Row index within each frame (frames are stacked along the row axis).
    in_row = jax.lax.broadcasted_iota(jnp.int32, (R, 1), 0) % H

    t0 = jnp.dot(x_rows, w_ref[0], preferred_element_type=jnp.float32)
    t1 = jnp.dot(x_rows, w_ref[1], preferred_element_type=jnp.float32)
    t2 = jnp.dot(x_rows, w_ref[2], preferred_element_type=jnp.float32)

    zrow = jnp.zeros((1, L_out), jnp.float32)
    # out[h] += x[h-1] @ w[0]  ->  down-shift t0 by one row; first row of
    # every frame gets zero (height zero-pad / frame isolation).
    t0_dn = jnp.where(in_row == 0, 0.0,
                      jnp.concatenate([zrow, t0], axis=0)[:R])
    # out[h] += x[h+1] @ w[2]  ->  up-shift t2 by one row; last row of every
    # frame gets zero.  (The offset-1 slice is the one sublane-misaligned op
    # left; pltpu.roll(axis=0) is the alternative if it ever shows up.)
    t2_up = jnp.where(in_row == H - 1, 0.0,
                      jnp.concatenate([t2, zrow], axis=0)[1:])
    return t0_dn + t1 + t2_up + b_ref[...]


# ----------------------------------------------------------------------------
# Kernels.
# ----------------------------------------------------------------------------
def _c1_kernel(l1_ref, c1_ref, r1_ref, w1_ref, b1_ref, y_ref, *, H, Cin):
    """Warm-up step: y = relu(conv1(shift(l1, c1, r1))) only."""
    s1 = _temporal_shift(l1_ref[...], c1_ref[...], r1_ref[...], Cin)
    y = jnp.maximum(_conv3x3_rows(s1, w1_ref, b1_ref, H), 0.0)
    y_ref[...] = y.astype(y_ref.dtype)


def _fused_kernel(l1_ref, c1_ref, r1_ref, l2_ref, c2_ref,
                  w1_ref, b1_ref, w2_ref, b2_ref,
                  y_ref, z_ref, *, H, Cin, Cout):
    """Steady state: y = relu(conv1(shift1)); z = conv2(shift2 using y)."""
    s1 = _temporal_shift(l1_ref[...], c1_ref[...], r1_ref[...], Cin)
    y = jnp.maximum(_conv3x3_rows(s1, w1_ref, b1_ref, H), 0.0)
    y_store = y.astype(y_ref.dtype)          # single cast; feeds c2 in-register
    y_ref[...] = y_store
    s2 = _temporal_shift(l2_ref[...], c2_ref[...], y_store, Cout)
    z_ref[...] = _conv3x3_rows(s2, w2_ref, b2_ref, H).astype(z_ref.dtype)


_VMEM_SPEC = pl.BlockSpec(memory_space=pltpu.MemorySpace.VMEM)


@functools.partial(jax.jit, static_argnames=("H", "Cin"))
def _c1_step(l1, c1, r1, w1p, b1row, *, H, Cin):
    R = l1.shape[0]
    L_out = b1row.shape[-1]
    kernel = functools.partial(_c1_kernel, H=H, Cin=Cin)
    return pl.pallas_call(
        kernel,
        out_shape=jax.ShapeDtypeStruct((R, L_out), l1.dtype),   # y, store dtype
        in_specs=[_VMEM_SPEC] * 5,
        out_specs=_VMEM_SPEC,
    )(l1, c1, r1, w1p, b1row)


@functools.partial(jax.jit, static_argnames=("H", "Cin", "Cout"))
def _fused_step(l1, c1, r1, l2, c2, w1p, b1row, w2p, b2row, *, H, Cin, Cout):
    R = l1.shape[0]
    L_out = b2row.shape[-1]
    kernel = functools.partial(_fused_kernel, H=H, Cin=Cin, Cout=Cout)
    return pl.pallas_call(
        kernel,
        out_shape=(jax.ShapeDtypeStruct((R, L_out), l2.dtype),      # y (store)
                   jax.ShapeDtypeStruct((R, L_out), jnp.float32)),  # z (f32)
        in_specs=[_VMEM_SPEC] * 9,
        out_specs=(_VMEM_SPEC, _VMEM_SPEC),
    )(l1, c1, r1, l2, c2, w1p, b1row, w2p, b2row)


# ----------------------------------------------------------------------------
# Stateful wrapper mirroring MemCvBlock (c1 -> relu -> c2 with buffering).
# ----------------------------------------------------------------------------
class PallasMemCvBlock:
    """(Conv2d => ReLU) => Conv2d with temporal-shift buffering (streaming)."""

    def __init__(self, in_channels, out_channels, height, width,
                 w1=None, b1=None, w2=None, b2=None,
                 compute_dtype=jnp.bfloat16):
        assert in_channels % 8 == 0 and out_channels % 8 == 0, (
            "channel-fold temporal shift (fold = C // 8) requires C % 8 == 0")
        self.H, self.W = height, width
        self.Cin, self.Cout = in_channels, out_channels
        self.L_in, self.L_out = width * in_channels, width * out_channels
        self.store_dtype = compute_dtype     # streaming buffers + y live in this
        # Defaults match the PyTorch __init__ (weights := ones, biases := zeros).
        if w1 is None: w1 = jnp.ones((3, 3, in_channels, out_channels), jnp.float32)
        if b1 is None: b1 = jnp.zeros((out_channels,), jnp.float32)
        if w2 is None: w2 = jnp.ones((3, 3, out_channels, out_channels), jnp.float32)
        if b2 is None: b2 = jnp.zeros((out_channels,), jnp.float32)
        # One-time host-side packing; MXU operands in compute_dtype, bias f32.
        self.w1p = jnp.asarray(_pack_banded_weights(w1, width), compute_dtype)
        self.w2p = jnp.asarray(_pack_banded_weights(w2, width), compute_dtype)
        self.b1row = jnp.tile(jnp.asarray(b1, jnp.float32), width).reshape(1, self.L_out)
        self.b2row = jnp.tile(jnp.asarray(b2, jnp.float32), width).reshape(1, self.L_out)
        # Streaming state, stored lane-packed (N*H, W*C) in store_dtype.
        self.left1 = None
        self.center1 = None
        self.left2 = None
        self.center2 = None

    def _pack_frame(self, x):
        n = x.shape[0]
        return x.reshape(n * self.H, self.L_in).astype(self.store_dtype)

    def __call__(self, x):
        """x: (N, H, W, Cin) NHWC frame (or None). Returns (N, H, W, Cout) or None."""
        if self.center1 is None:
            if x is None:
                return None
            self.center1 = self._pack_frame(x)
            self.left1 = jnp.zeros_like(self.center1)
            return None
        if x is None:
            # TODO(synk): terminal flush (input None with a live center) is
            # NotImplementedError in the PyTorch reference too; not modeled.
            raise NotImplementedError
        right1 = self._pack_frame(x)
        n = x.shape[0]
        if self.center2 is None:
            # Warm-up step: c2 only buffers y -> run the c1-only kernel.
            y = _c1_step(self.left1, self.center1, right1, self.w1p, self.b1row,
                         H=self.H, Cin=self.Cin)
            self.left1, self.center1 = self.center1, right1
            self.left2 = jnp.zeros_like(y)
            self.center2 = y
            return None
        y, z = _fused_step(
            self.left1, self.center1, right1, self.left2, self.center2,
            self.w1p, self.b1row, self.w2p, self.b2row,
            H=self.H, Cin=self.Cin, Cout=self.Cout)
        # Roll c1's buffers (raw frames) and c2's buffers (relu'd c1 outputs).
        self.left1, self.center1 = self.center1, right1
        self.left2, self.center2 = self.center2, y
        return z.reshape(n, self.H, self.W, self.Cout)


# ----------------------------------------------------------------------------
# Pure-JAX (XLA) reference with identical streaming semantics.
# ----------------------------------------------------------------------------
def _ref_shift_conv(left, center, right, w, b, apply_relu):
    c = center.shape[-1]
    fold = c // 8
    shifted = jnp.concatenate(
        [right[..., :fold], left[..., fold:2 * fold], center[..., 2 * fold:]],
        axis=-1)
    out = jax.lax.conv_general_dilated(
        shifted, w, window_strides=(1, 1), padding="SAME",
        dimension_numbers=("NHWC", "HWIO", "NHWC")) + b
    return jnp.maximum(out, 0.0) if apply_relu else out


class RefMemCvBlock:
    def __init__(self, w1, b1, w2, b2):
        self.w1, self.b1, self.w2, self.b2 = w1, b1, w2, b2
        self.left1 = self.center1 = self.left2 = self.center2 = None

    def __call__(self, x):
        if self.center1 is None:
            self.center1 = x
            self.left1 = jnp.zeros_like(x)
            return None
        y = _ref_shift_conv(self.left1, self.center1, x, self.w1, self.b1, True)
        self.left1, self.center1 = self.center1, x
        if self.center2 is None:
            self.center2 = y
            self.left2 = jnp.zeros_like(y)
            return None
        z = _ref_shift_conv(self.left2, self.center2, y, self.w2, self.b2, False)
        self.left2, self.center2 = self.center2, y
        return z


def _run_stream(blk, ref, frames, out_shape, atol, rtol, tag):
    produced = False
    for t, f in enumerate(frames):
        out, out_ref = blk(f), ref(f)
        assert (out is None) == (out_ref is None), f"[{tag}] None-mismatch @ step {t}"
        if out is not None:
            out = jax.block_until_ready(out)
            assert out.shape == out_shape, f"[{tag}] shape mismatch @ step {t}"
            err = float(jnp.max(jnp.abs(out - out_ref)))
            assert jnp.allclose(out, out_ref, atol=atol, rtol=rtol), (
                f"[{tag}] numerical mismatch @ step {t}: max|diff|={err}")
            produced = True
    assert produced, f"[{tag}] stream produced no real outputs"


if __name__ == "__main__":
    # PyTorch per-frame NCHW = [2, 8, 16, 16]  <->  NHWC = [2, 16, 16, 8] here.
    N, Cin, Cout, H, W = 2, 8, 8, 16, 16
    key = jax.random.PRNGKey(0)
    k_fr, k_int, k_w1, k_b1, k_w2, k_b2 = jax.random.split(key, 6)

    # --- Test 1: module's default params (ones/zeros) with small-integer frames.
    #     All arithmetic is exact in every MXU precision mode and in bf16
    #     storage (|values| < 256) -> tight check of padding, tap placement,
    #     temporal-shift folds, frame-boundary masking and streaming state.
    int_frames = [jax.random.randint(k, (N, H, W, Cin), -3, 4).astype(jnp.float32)
                  for k in jax.random.split(k_int, 5)]
    blk = PallasMemCvBlock(Cin, Cout, H, W)                 # default init, bf16
    ref = RefMemCvBlock(jnp.ones((3, 3, Cin, Cout)), jnp.zeros((Cout,)),
                        jnp.ones((3, 3, Cout, Cout)), jnp.zeros((Cout,)))
    _run_stream(blk, ref, int_frames, (N, H, W, Cout), atol=1e-2, rtol=0.0,
                tag="ones-exact")

    # --- Test 2: random weights/biases + random frames (catches tap ordering,
    #     HWIO indexing, banded packing and fold-permutation bugs).
    frames = [jax.random.normal(k, (N, H, W, Cin), jnp.float32)
              for k in jax.random.split(k_fr, 5)]
    w1 = jax.random.normal(k_w1, (3, 3, Cin, Cout), jnp.float32) / np.sqrt(9 * Cin)
    b1 = 0.1 * jax.random.normal(k_b1, (Cout,), jnp.float32)
    w2 = jax.random.normal(k_w2, (3, 3, Cout, Cout), jnp.float32) / np.sqrt(9 * Cout)
    b2 = 0.1 * jax.random.normal(k_b2, (Cout,), jnp.float32)
    for cd, tol, tag in [(jnp.float32, 5e-2, "random-f32"),
                         (jnp.bfloat16, 1e-1, "random-bf16")]:
        blk = PallasMemCvBlock(Cin, Cout, H, W, w1=w1, b1=b1, w2=w2, b2=b2,
                               compute_dtype=cd)
        ref = RefMemCvBlock(w1, b1, w2, b2)
        _run_stream(blk, ref, frames, (N, H, W, Cout), atol=tol, rtol=tol, tag=tag)

    print("KERNEL_OK")
</pallas_src>

<mosaic_0001>
module attributes {stable_mosaic.version = 11 : i64} {
  func.func @_c1_kernel(%arg0: memref<32x128xbf16, #tpu.memory_space<vmem>>, %arg1: memref<32x128xbf16, #tpu.memory_space<vmem>>, %arg2: memref<32x128xbf16, #tpu.memory_space<vmem>>, %arg3: memref<3x128x128xbf16, #tpu.memory_space<vmem>>, %arg4: memref<1x128xf32, #tpu.memory_space<vmem>>, %arg5: memref<32x128xbf16, #tpu.memory_space<vmem>>) attributes {dimension_semantics = [], scalar_prefetch = 0 : i64, scratch_operands = 0 : i64, tpu.core_type = #tpu.core_type<tc>} {
    %c0 = arith.constant 0 : index
    %c0_0 = arith.constant 0 : index
    %0 = vector.load %arg0[%c0, %c0_0] : memref<32x128xbf16, #tpu.memory_space<vmem>>, vector<32x128xbf16>
    %c0_1 = arith.constant 0 : index
    %c0_2 = arith.constant 0 : index
    %1 = vector.load %arg1[%c0_1, %c0_2] : memref<32x128xbf16, #tpu.memory_space<vmem>>, vector<32x128xbf16>
    %c0_3 = arith.constant 0 : index
    %c0_4 = arith.constant 0 : index
    %2 = vector.load %arg2[%c0_3, %c0_4] : memref<32x128xbf16, #tpu.memory_space<vmem>>, vector<32x128xbf16>
    %3 = tpu.iota {dimensions = array<i32: 1>} : vector<1x128xi32>
    %c8_i32 = arith.constant 8 : i32
    %c0_i32 = arith.constant 0 : i32
    %4 = arith.cmpi eq, %c8_i32, %c0_i32 : i32
    %c1_i32 = arith.constant 1 : i32
    %5 = arith.select %4, %c1_i32, %c8_i32 : i32
    %6 = vector.broadcast %5 : i32 to vector<1x128xi32>
    %7 = arith.remsi %3, %6 : vector<1x128xi32>
    %c0_i32_5 = arith.constant 0 : i32
    %8 = vector.broadcast %c0_i32_5 : i32 to vector<1x128xi32>
    %9 = arith.cmpi ne, %7, %8 : vector<1x128xi32>
    %c0_i32_6 = arith.constant 0 : i32
    %10 = vector.broadcast %c0_i32_6 : i32 to vector<1x128xi32>
    %11 = arith.cmpi slt, %7, %10 : vector<1x128xi32>
    %c0_i32_7 = arith.constant 0 : i32
    %12 = arith.cmpi slt, %5, %c0_i32_7 : i32
    %13 = vector.broadcast %12 : i1 to vector<1x128xi1>
    %14 = vector.broadcast %13 : vector<1x128xi1> to vector<1x128xi1>
    %15 = arith.xori %11, %14 : vector<1x128xi1>
    %16 = arith.andi %15, %9 : vector<1x128xi1>
    %17 = vector.broadcast %5 : i32 to vector<1x128xi32>
    %18 = arith.addi %7, %17 : vector<1x128xi32>
    %19 = arith.select %16, %18, %7 : vector<1x128xi1>, vector<1x128xi32>
    %c1_i32_8 = arith.constant 1 : i32
    %20 = vector.broadcast %c1_i32_8 : i32 to vector<1x128xi32>
    %21 = arith.cmpi slt, %19, %20 : vector<1x128xi32>
    %c2_i32 = arith.constant 2 : i32
    %22 = vector.broadcast %c2_i32 : i32 to vector<1x128xi32>
    %23 = arith.cmpi slt, %19, %22 : vector<1x128xi32>
    %24 = vector.shape_cast %23 : vector<1x128xi1> to vector<1x128xi1>
    %25 = vector.broadcast %24 : vector<1x128xi1> to vector<32x128xi1>
    %26 = arith.select %25, %0, %1 : vector<32x128xi1>, vector<32x128xbf16>
    %27 = vector.shape_cast %21 : vector<1x128xi1> to vector<1x128xi1>
    %28 = vector.broadcast %27 : vector<1x128xi1> to vector<32x128xi1>
    %29 = arith.select %28, %2, %26 : vector<32x128xi1>, vector<32x128xbf16>
    %30 = tpu.iota {dimensions = array<i32: 0>} : vector<32x1xi32>
    %c16_i32 = arith.constant 16 : i32
    %c0_i32_9 = arith.constant 0 : i32
    %31 = arith.cmpi eq, %c16_i32, %c0_i32_9 : i32
    %c1_i32_10 = arith.constant 1 : i32
    %32 = arith.select %31, %c1_i32_10, %c16_i32 : i32
    %33 = vector.broadcast %32 : i32 to vector<32x1xi32>
    %34 = arith.remsi %30, %33 : vector<32x1xi32>
    %c0_i32_11 = arith.constant 0 : i32
    %35 = vector.broadcast %c0_i32_11 : i32 to vector<32x1xi32>
    %36 = arith.cmpi ne, %34, %35 : vector<32x1xi32>
    %c0_i32_12 = arith.constant 0 : i32
    %37 = vector.broadcast %c0_i32_12 : i32 to vector<32x1xi32>
    %38 = arith.cmpi slt, %34, %37 : vector<32x1xi32>
    %c0_i32_13 = arith.constant 0 : i32
    %39 = arith.cmpi slt, %32, %c0_i32_13 : i32
    %40 = vector.broadcast %39 : i1 to vector<32x1xi1>
    %41 = vector.broadcast %40 : vector<32x1xi1> to vector<32x1xi1>
    %42 = arith.xori %38, %41 : vector<32x1xi1>
    %43 = arith.andi %42, %36 : vector<32x1xi1>
    %44 = vector.broadcast %32 : i32 to vector<32x1xi32>
    %45 = arith.addi %34, %44 : vector<32x1xi32>
    %46 = arith.select %43, %45, %34 : vector<32x1xi1>, vector<32x1xi32>
    %c0_14 = arith.constant 0 : index
    %c0_15 = arith.constant 0 : index
    %c0_16 = arith.constant 0 : index
    %47 = vector.load %arg3[%c0_14, %c0_15, %c0_16] : memref<3x128x128xbf16, #tpu.memory_space<vmem>>, vector<1x128x128xbf16>
    %48 = vector.shape_cast %47 : vector<1x128x128xbf16> to vector<128x128xbf16>
    %cst = arith.constant dense<0.000000e+00> : vector<32x128xf32>
    %49 = tpu.matmul %29, %48, %cst {dimension_numbers = #tpu.dot_dimension_numbers<[1], [0], [0], [1], [0, 0, 1, 1], [], []>} : vector<32x128xbf16>, vector<128x128xbf16>, vector<32x128xf32> -> vector<32x128xf32>
    %c1 = arith.constant 1 : index
    %c0_17 = arith.constant 0 : index
    %c0_18 = arith.constant 0 : index
    %50 = vector.load %arg3[%c1, %c0_17, %c0_18] : memref<3x128x128xbf16, #tpu.memory_space<vmem>>, vector<1x128x128xbf16>
    %51 = vector.shape_cast %50 : vector<1x128x128xbf16> to vector<128x128xbf16>
    %cst_19 = arith.constant dense<0.000000e+00> : vector<32x128xf32>
    %52 = tpu.matmul %29, %51, %cst_19 {dimension_numbers = #tpu.dot_dimension_numbers<[1], [0], [0], [1], [0, 0, 1, 1], [], []>} : vector<32x128xbf16>, vector<128x128xbf16>, vector<32x128xf32> -> vector<32x128xf32>
    %c2 = arith.constant 2 : index
    %c0_20 = arith.constant 0 : index
    %c0_21 = arith.constant 0 : index
    %53 = vector.load %arg3[%c2, %c0_20, %c0_21] : memref<3x128x128xbf16, #tpu.memory_space<vmem>>, vector<1x128x128xbf16>
    %54 = vector.shape_cast %53 : vector<1x128x128xbf16> to vector<128x128xbf16>
    %cst_22 = arith.constant dense<0.000000e+00> : vector<32x128xf32>
    %55 = tpu.matmul %29, %54, %cst_22 {dimension_numbers = #tpu.dot_dimension_numbers<[1], [0], [0], [1], [0, 0, 1, 1], [], []>} : vector<32x128xbf16>, vector<128x128xbf16>, vector<32x128xf32> -> vector<32x128xf32>
    %cst_23 = arith.constant 0.000000e+00 : f32
    %56 = vector.broadcast %cst_23 : f32 to vector<1x128xf32>
    %c0_i32_24 = arith.constant 0 : i32
    %57 = vector.broadcast %c0_i32_24 : i32 to vector<32x1xi32>
    %58 = arith.cmpi eq, %46, %57 : vector<32x1xi32>
    %59 = tpu.concatenate %56, %49 in 0 : vector<1x128xf32>, vector<32x128xf32> -> vector<33x128xf32>
    %60 = vector.extract_strided_slice %59 {offsets = [0, 0], sizes = [32, 128], strides = [1, 1]} : vector<33x128xf32> to vector<32x128xf32>
    %cst_25 = arith.constant 0.000000e+00 : f32
    %61 = vector.shape_cast %58 : vector<32x1xi1> to vector<32x1xi1>
    %62 = vector.broadcast %61 : vector<32x1xi1> to vector<32x128xi1>
    %63 = vector.broadcast %cst_25 : f32 to vector<32x128xf32>
    %64 = arith.select %62, %63, %60 : vector<32x128xi1>, vector<32x128xf32>
    %c15_i32 = arith.constant 15 : i32
    %65 = vector.broadcast %c15_i32 : i32 to vector<32x1xi32>
    %66 = arith.cmpi eq, %46, %65 : vector<32x1xi32>
    %67 = tpu.concatenate %55, %56 in 0 : vector<32x128xf32>, vector<1x128xf32> -> vector<33x128xf32>
    %68 = vector.extract_strided_slice %67 {offsets = [1, 0], sizes = [32, 128], strides = [1, 1]} : vector<33x128xf32> to vector<32x128xf32>
    %cst_26 = arith.constant 0.000000e+00 : f32
    %69 = vector.shape_cast %66 : vector<32x1xi1> to vector<32x1xi1>
    %70 = vector.broadcast %69 : vector<32x1xi1> to vector<32x128xi1>
    %71 = vector.broadcast %cst_26 : f32 to vector<32x128xf32>
    %72 = arith.select %70, %71, %68 : vector<32x128xi1>, vector<32x128xf32>
    %73 = arith.addf %64, %52 : vector<32x128xf32>
    %74 = arith.addf %73, %72 : vector<32x128xf32>
    %c0_27 = arith.constant 0 : index
    %c0_28 = arith.constant 0 : index
    %75 = vector.load %arg4[%c0_27, %c0_28] : memref<1x128xf32, #tpu.memory_space<vmem>>, vector<1x128xf32>
    %76 = vector.broadcast %75 : vector<1x128xf32> to vector<32x128xf32>
    %77 = arith.addf %74, %76 : vector<32x128xf32>
    %cst_29 = arith.constant 0.000000e+00 : f32
    %78 = vector.broadcast %cst_29 : f32 to vector<32x128xf32>
    %79 = arith.maximumf %77, %78 : vector<32x128xf32>
    %80 = arith.truncf %79 : vector<32x128xf32> to vector<32x128xbf16>
    %c0_30 = arith.constant 0 : index
    %c0_31 = arith.constant 0 : index
    %81 = vector.load %arg5[%c0_30, %c0_31] : memref<32x128xbf16, #tpu.memory_space<vmem>>, vector<32x128xbf16>
    tpu.vector_store %arg5[%c0_30, %c0_31], %80 {strides = array<i32>} : memref<32x128xbf16, #tpu.memory_space<vmem>>, vector<32x128xbf16>,
    return
  }
}

</mosaic_0001>

<llo_original>
// kernel: _c1_step.1
$region0: #{_c1_step.1}
  #allocation0 [shape = 'u32[]', space=smem, size = 0x4, offset = 0x4, fixed_abs, tag = 'smem constant byte address 0x4 - core index']
  #allocation1 [shape = 'u32[144,128]{1,0:T(1,128)}', space=vmem, size = 0x12000, scoped, tag = 'internal scratch']
  %s0 = inlined_call_operand.hbm [shape: bf16[32,128], index: 0, kind: input, shape index: {}]
  %s1 = inlined_call_operand.hbm [shape: bf16[32,128], index: 1, kind: input, shape index: {}]
  %s2 = inlined_call_operand.hbm [shape: bf16[32,128], index: 2, kind: input, shape index: {}]
  %s3 = inlined_call_operand.hbm [shape: bf16[3,128,128], index: 3, kind: input, shape index: {}]
  %s4 = inlined_call_operand.vmem [shape: f32[1,128], index: 4, kind: input, shape index: {}]
  %s5 = inlined_call_operand.hbm [shape: bf16[32,128], index: 5, kind: output, shape index: {}]
  %s6 = sld [smem:[#allocation0]]
  $region46: #{_c1_step.1} parent=0
    _
  %s8 = ssub.s32 1, %s6
  %s9 = scalar_select 0, %s8, %s6
  $region1: #{_c1_step.1} parent=0
    #allocation2 [shape = 'u8[8192]{0}', space=vmem, size = 0x2000, scoped, tag = 'input window, operand 0, single buffered']
    #allocation3 [shape = 's32[1]{0}', space=sflag, size = 0x4, scoped, tag = 'scoped memory for _c1_step.1']
    #allocation4 [shape = 's32[1]{0}', space=sflag, size = 0x4, scoped, tag = 'scoped memory for _c1_step.1']
    #allocation5 [shape = 'u8[8192]{0}', space=vmem, size = 0x2000, scoped, tag = 'input window, operand 1, single buffered']
    #allocation6 [shape = 's32[1]{0}', space=sflag, size = 0x4, scoped, tag = 'scoped memory for _c1_step.1']
    #allocation7 [shape = 'u8[8192]{0}', space=vmem, size = 0x2000, scoped, tag = 'input window, operand 2, single buffered']
    #allocation8 [shape = 'u8[98304]{0}', space=vmem, size = 0x18000, scoped, tag = 'input window, operand 3, single buffered']
    #allocation9 [shape = 's32[1]{0}', space=sflag, size = 0x4, scoped, tag = 'scoped memory for _c1_step.1']
    #allocation10 [shape = 'u8[8192]{0}', space=vmem, size = 0x2000, scoped, tag = 'output window, operand 0, single buffered']
    %10 = vsyncpa [#allocation3], 0
    %11 = vsyncpa [#allocation6], 0
    %12 = vsyncpa [#allocation9], 0
    %13 = vsyncpa [#allocation4], 0
    // Predicated region
    $region2: #{_c1_step.1} parent=1 // pred_check
      _
    $region3: #{_c1_step.1} parent=1 // pred_check_branch
      %15 = sbr.rel (0) target = $region5
    $region4: #{_c1_step.1} parent=1 // pred_region
      %s17 = ssub.s32 256, 256
      %18 = vsyncadd [#allocation3], %s17
      %s19 = sshll.u32 [#allocation2], 4
      %s20 = int_to_ptr.vmem [resolvable:$true] %s19
      %25 = dma.hbm_to_vmem [thread:$0]  %s0, 256, %s20, [#allocation3], 64, 64, 4
    $region5: #{_c1_step.1} parent=1 // pred_fallthru
      _
    // Predicated region
    $region6: #{_c1_step.1} parent=1 // pred_check
      _
    $region7: #{_c1_step.1} parent=1 // pred_check_branch
      %27 = sbr.rel (0) target = $region9
    $region8: #{_c1_step.1} parent=1 // pred_region
      %s29 = ssub.s32 256, 256
      %30 = vsyncadd [#allocation6], %s29
      %s31 = sshll.u32 [#allocation5], 4
      %s32 = int_to_ptr.vmem [resolvable:$true] %s31
      %37 = dma.hbm_to_vmem [thread:$0]  %s1, 256, %s32, [#allocation6], 64, 64, 4
    $region9: #{_c1_step.1} parent=1 // pred_fallthru
      _
    // Predicated region
    $region10: #{_c1_step.1} parent=1 // pred_check
      _
    $region11: #{_c1_step.1} parent=1 // pred_check_branch
      %39 = sbr.rel (0) target = $region13
    $region12: #{_c1_step.1} parent=1 // pred_region
      %s41 = ssub.s32 256, 256
      %42 = vsyncadd [#allocation6], %s41
      %s43 = sshll.u32 [#allocation7], 4
      %s44 = int_to_ptr.vmem [resolvable:$true] %s43
      %49 = dma.hbm_to_vmem [thread:$0]  %s2, 256, %s44, [#allocation6], 64, 64, 4
    $region13: #{_c1_step.1} parent=1 // pred_fallthru
      _
    // Predicated region
    $region14: #{_c1_step.1} parent=1 // pred_check
      _
    $region15: #{_c1_step.1} parent=1 // pred_check_branch
      %51 = sbr.rel (0) target = $region17
    $region16: #{_c1_step.1} parent=1 // pred_region
      %s53 = ssub.s32 3072, 3072
      %54 = vsyncadd [#allocation9], %s53
      %s55 = sshll.u32 [#allocation8], 4
      %s56 = int_to_ptr.vmem [resolvable:$true] %s55
      %61 = dma.hbm_to_vmem [thread:$0]  %s3, 3072, %s56, [#allocation9], 64, 64, 4
    $region17: #{_c1_step.1} parent=1 // pred_fallthru
      _
    // Predicated region
    $region18: #{_c1_step.1} parent=1 // pred_check
      _
    $region19: #{_c1_step.1} parent=1 // pred_check_branch
      %63 = sbr.rel (0) target = $region21
    $region20: #{_c1_step.1} parent=1 // pred_region
      _
    $region21: #{_c1_step.1} parent=1 // pred_fallthru
      _
    // Predicated region
    $region22: #{_c1_step.1} parent=1 // pred_check
      _
    $region23: #{_c1_step.1} parent=1 // pred_check_branch
      %65 = sbr.rel (0) target = $region25
    $region24: #{_c1_step.1} parent=1 // pred_region
      %66 = dma.done [#allocation3], 256
    $region25: #{_c1_step.1} parent=1 // pred_fallthru
      _
    // Predicated region
    $region26: #{_c1_step.1} parent=1 // pred_check
      _
    $region27: #{_c1_step.1} parent=1 // pred_check_branch
      %68 = sbr.rel (0) target = $region29
    $region28: #{_c1_step.1} parent=1 // pred_region
      %69 = dma.done [#allocation6], 256
    $region29: #{_c1_step.1} parent=1 // pred_fallthru
      _
    // Predicated region
    $region30: #{_c1_step.1} parent=1 // pred_check
      _
    $region31: #{_c1_step.1} parent=1 // pred_check_branch
      %71 = sbr.rel (0) target = $region33
    $region32: #{_c1_step.1} parent=1 // pred_region
      %72 = dma.done [#allocation6], 256
    $region33: #{_c1_step.1} parent=1 // pred_fallthru
      _
    // Predicated region
    $region34: #{_c1_step.1} parent=1 // pred_check
      _
    $region35: #{_c1_step.1} parent=1 // pred_check_branch
      %74 = sbr.rel (0) target = $region37
    $region36: #{_c1_step.1} parent=1 // pred_region
      %75 = dma.done [#allocation9], 3072
    $region37: #{_c1_step.1} parent=1 // pred_fallthru
      _
    %v77 = vld [vmem:[#allocation2] sm:$0xf]
    %v78 = vld [vmem:[#allocation2 + $0x4] sm:$0xf]
    %v79 = vld [vmem:[#allocation2 + $0x8] sm:$0xf]
    %v80 = vld [vmem:[#allocation2 + $0xc] sm:$0xf]
    %v81 = vld [vmem:[#allocation5] sm:$0xf]
    %v82 = vld [vmem:[#allocation5 + $0x4] sm:$0xf]
    %v83 = vld [vmem:[#allocation5 + $0x8] sm:$0xf]
    %v84 = vld [vmem:[#allocation5 + $0xc] sm:$0xf]
    %v85 = vld [vmem:[#allocation7] sm:$0xf]
    %v86 = vld [vmem:[#allocation7 + $0x4] sm:$0xf]
    %v87 = vld [vmem:[#allocation7 + $0x8] sm:$0xf]
    %v88 = vld [vmem:[#allocation7 + $0xc] sm:$0xf]
    %v89 = vlaneseq
    %v90 = vand.u32 %v89, 127
    %vm91 = vcmp.lt.s32.totalorder %v90, 0
    %v92 = vsub.s32 0, %v90
    %v93 = vsel %vm91, %v92, %v90
    %v94 = vshrl.u32 %v93, 3
    %v95 = vand.u32 %v93, 7
    %v96 = vsub.s32 0, %v95
    %v97 = vsel %vm91, %v96, %v95
    %vm98 = vcmp.ne.s32.totalorder %v97, 0
    %vm99 = vcmp.lt.s32.totalorder %v97, 0
    %vm100 = vmand %vm99, %vm98
    %v101 = vadd.s32 %v97, 8
    %v102 = vsel %vm100, %v101, %v97
    %vm103 = vcmp.lt.s32.totalorder %v102, 1
    %vm104 = vcmp.lt.s32.totalorder %v102, 2
    %v105 = vsel %vm104, 1, 0
    %vm106 = vcmp.eq.s32.totalorder %v105, 1
    %vm107 = vmpackc.low %vm106, %vm106
    %v108 = vsel %vm107, %v77, %v81
    %v109 = vsel %vm107, %v78, %v82
    %v110 = vsel %vm107, %v79, %v83
    %v111 = vsel %vm107, %v80, %v84
    %v112 = vsel %vm103, 1, 0
    %vm113 = vcmp.eq.s32.totalorder %v112, 1
    %vm114 = vmpackc.low %vm113, %vm113
    %v115 = vsel %vm114, %v85, %v108
    %v116 = vsel %vm114, %v86, %v109
    %v117 = vsel %vm114, %v87, %v110
    %v118 = vsel %vm114, %v88, %v111
    %v119 = vlaneseq
    %v120 = vshrl.u32 %v119, 7
    %v121 = vadd.s32 %v120, 8
    %v122 = vadd.s32 %v120, 16
    %v123 = vadd.s32 %v120, 24
    %vm124 = vcmp.lt.s32.totalorder %v120, 0
    %v125 = vsub.s32 0, %v120
    %v126 = vsel %vm124, %v125, %v120
    %v127 = vshrl.u32 %v126, 4
    %v128 = vand.u32 %v126, 15
    %v129 = vsub.s32 0, %v128
    %v130 = vsel %vm124, %v129, %v128
    %vm131 = vcmp.lt.s32.totalorder %v121, 0
    %v132 = vsub.s32 0, %v121
    %v133 = vsel %vm131, %v132, %v121
    %v134 = vshrl.u32 %v133, 4
    %v135 = vand.u32 %v133, 15
    %v136 = vsub.s32 0, %v135
    %v137 = vsel %vm131, %v136, %v135
    %vm138 = vcmp.lt.s32.totalorder %v122, 0
    %v139 = vsub.s32 0, %v122
    %v140 = vsel %vm138, %v139, %v122
    %v141 = vshrl.u32 %v140, 4
    %v142 = vand.u32 %v140, 15
    %v143 = vsub.s32 0, %v142
    %v144 = vsel %vm138, %v143, %v142
    %vm145 = vcmp.lt.s32.totalorder %v123, 0
    %v146 = vsub.s32 0, %v123
    %v147 = vsel %vm145, %v146, %v123
    %v148 = vshrl.u32 %v147, 4
    %v149 = vand.u32 %v147, 15
    %v150 = vsub.s32 0, %v149
    %v151 = vsel %vm145, %v150, %v149
    %vm152 = vcmp.ne.s32.totalorder %v130, 0
    %vm153 = vcmp.ne.s32.totalorder %v137, 0
    %vm154 = vcmp.ne.s32.totalorder %v144, 0
    %vm155 = vcmp.ne.s32.totalorder %v151, 0
    %vm156 = vcmp.lt.s32.totalorder %v130, 0
    %vm157 = vcmp.lt.s32.totalorder %v137, 0
    %vm158 = vcmp.lt.s32.totalorder %v144, 0
    %vm159 = vcmp.lt.s32.totalorder %v151, 0
    %vm160 = vmand %vm156, %vm152
    %vm161 = vmand %vm157, %vm153
    %vm162 = vmand %vm158, %vm154
    %vm163 = vmand %vm159, %vm155
    %v164 = vadd.s32 %v130, 16
    %v165 = vadd.s32 %v137, 16
    %v166 = vadd.s32 %v144, 16
    %v167 = vadd.s32 %v151, 16
    %v168 = vsel %vm160, %v164, %v130
    %v169 = vsel %vm161, %v165, %v137
    %v170 = vsel %vm162, %v166, %v144
    %v171 = vsel %vm163, %v167, %v151
    %v172 = vld [vmem:[#allocation8] sm:$0xf]
    %v173 = vld [vmem:[#allocation8 + $0x4] sm:$0xf]
    %v174 = vld [vmem:[#allocation8 + $0x8] sm:$0xf]
    %v175 = vld [vmem:[#allocation8 + $0xc] sm:$0xf]
    %v176 = vld [vmem:[#allocation8 + $0x10] sm:$0xf]
    %v177 = vld [vmem:[#allocation8 + $0x14] sm:$0xf]
    %v178 = vld [vmem:[#allocation8 + $0x18] sm:$0xf]
    %v179 = vld [vmem:[#allocation8 + $0x1c] sm:$0xf]
    %v180 = vld [vmem:[#allocation8 + $0x20] sm:$0xf]
    %v181 = vld [vmem:[#allocation8 + $0x24] sm:$0xf]
    %v182 = vld [vmem:[#allocation8 + $0x28] sm:$0xf]
    %v183 = vld [vmem:[#allocation8 + $0x2c] sm:$0xf]
    %v184 = vld [vmem:[#allocation8 + $0x30] sm:$0xf]
    %v185 = vld [vmem:[#allocation8 + $0x34] sm:$0xf]
    %v186 = vld [vmem:[#allocation8 + $0x38] sm:$0xf]
    %v187 = vld [vmem:[#allocation8 + $0x3c] sm:$0xf]
    %v192 = vunpack.c.l.b16 %v115
    %v193 = vunpack.c.l.b16 %v116
    %v194 = vunpack.c.l.b16 %v117
    %v195 = vunpack.c.l.b16 %v118
    %v196 = vpack.c.b16 %v193, %v192
    %v197 = vpack.c.b16 %v195, %v194
    %v216 = vunpack.c.l.b16 %v172
    %v217 = vunpack.c.l.b16 %v173
    %v218 = vunpack.c.l.b16 %v174
    %v219 = vunpack.c.l.b16 %v175
    %v220 = vunpack.c.l.b16 %v176
    %v221 = vunpack.c.l.b16 %v177
    %v222 = vunpack.c.l.b16 %v178
    %v223 = vunpack.c.l.b16 %v179
    %v224 = vunpack.c.l.b16 %v180
    %v225 = vunpack.c.l.b16 %v181
    %v226 = vunpack.c.l.b16 %v182
    %v227 = vunpack.c.l.b16 %v183
    %v228 = vunpack.c.l.b16 %v184
    %v229 = vunpack.c.l.b16 %v185
    %v230 = vunpack.c.l.b16 %v186
    %v231 = vunpack.c.l.b16 %v187
    %v232 = vpack.c.b16 %v217, %v216
    %v233 = vpack.c.b16 %v219, %v218
    %v234 = vpack.c.b16 %v221, %v220
    %v235 = vpack.c.b16 %v223, %v222
    %v236 = vpack.c.b16 %v225, %v224
    %v237 = vpack.c.b16 %v227, %v226
    %v238 = vpack.c.b16 %v229, %v228
    %v239 = vpack.c.b16 %v231, %v230
    %248 = vmatprep.subr.bf16.mxu0 0
    %249 = vmatpush1.bf16.msra.mxu0 %v232
    %250 = vmatprep.subr.bf16.mxu0 0
    %251 = vmatpush1.bf16.msra.mxu0 %v233
    %252 = vmatprep.subr.bf16.mxu0 0
    %253 = vmatpush1.bf16.msra.mxu0 %v234
    %254 = vmatprep.subr.bf16.mxu0 0
    %255 = vmatpush1.bf16.msra.mxu0 %v235
    %256 = vmatprep.subr.bf16.mxu0 0
    %257 = vmatpush1.bf16.msra.mxu0 %v236
    %258 = vmatprep.subr.bf16.mxu0 0
    %259 = vmatpush1.bf16.msra.mxu0 %v237
    %260 = vmatprep.subr.bf16.mxu0 0
    %261 = vmatpush1.bf16.msra.mxu0 %v238
    %262 = vmatprep.subr.bf16.mxu0 0
    %263 = vmatpush1.bf16.msra.mxu0 %v239
    %264 = vmatprep.subr.bf16.mxu0 0
    %265 = vmatpush1.bf16.msra.mxu0 0
    %266 = vmatprep.subr.bf16.mxu0 0
    %267 = vmatpush1.bf16.msra.mxu0 0
    %268 = vmatprep.subr.bf16.mxu0 0
    %269 = vmatpush1.bf16.msra.mxu0 0
    %270 = vmatprep.subr.bf16.mxu0 0
    %271 = vmatpush1.bf16.msra.mxu0 0
    %272 = vmatprep.subr.bf16.mxu0 0
    %273 = vmatpush1.bf16.msra.mxu0 0
    %274 = vmatprep.subr.bf16.mxu0 0
    %275 = vmatpush1.bf16.msra.mxu0 0
    %276 = vmatprep.subr.bf16.mxu0 0
    %277 = vmatpush1.bf16.msra.mxu0 0
    %278 = vmatprep.subr.bf16.mxu0 0
    %279 = vmatpush1.bf16.msra.mxu0 0
    %280 = vmatprep.mubr.bf16.mxu0 0
    %281 = vmatmul.mubr.bf16.gmra.mrb[0].mxu0 %v196
    %v282 = vpop.f32.mrb[0].mxu0
    %v283 = vadd.f32 0.0, %v282
    %v284 = vpop.f32.mrb[0].mxu0
    %v285 = vpop.f32.mrb[0].mxu0
    %v286 = vadd.f32 0.0, %v285
    %v287 = vpop.f32.mrb[0].mxu0
    %288 = vmatprep.mubr.bf16.mxu0 0
    %289 = vmatmul.mubr.bf16.gmra.mrb[0].mxu0 %v197
    %v290 = vpop.f32.mrb[0].mxu0
    %v291 = vadd.f32 0.0, %v290
    %v292 = vpop.f32.mrb[0].mxu0
    %v293 = vpop.f32.mrb[0].mxu0
    %v294 = vadd.f32 0.0, %v293
    %v295 = vpop.f32.mrb[0].mxu0
    %296 = vdwg.mxu0
    %s297 = scalar_lea.vmem [#allocation8], 64
    %v298 = vld [vmem:[%s297] sm:$0xf]
    %v299 = vld [vmem:[%s297 + $0x4] sm:$0xf]
    %v300 = vld [vmem:[%s297 + $0x8] sm:$0xf]
    %v301 = vld [vmem:[%s297 + $0xc] sm:$0xf]
    %v302 = vld [vmem:[%s297 + $0x10] sm:$0xf]
    %v303 = vld [vmem:[%s297 + $0x14] sm:$0xf]
    %v304 = vld [vmem:[%s297 + $0x18] sm:$0xf]
    %v305 = vld [vmem:[%s297 + $0x1c] sm:$0xf]
    %v306 = vld [vmem:[%s297 + $0x20] sm:$0xf]
    %v307 = vld [vmem:[%s297 + $0x24] sm:$0xf]
    %v308 = vld [vmem:[%s297 + $0x28] sm:$0xf]
    %v309 = vld [vmem:[%s297 + $0x2c] sm:$0xf]
    %v310 = vld [vmem:[%s297 + $0x30] sm:$0xf]
    %v311 = vld [vmem:[%s297 + $0x34] sm:$0xf]
    %v312 = vld [vmem:[%s297 + $0x38] sm:$0xf]
    %v313 = vld [vmem:[%s297 + $0x3c] sm:$0xf]
    %v330 = vunpack.c.l.b16 %v298
    %v331 = vunpack.c.l.b16 %v299
    %v332 = vunpack.c.l.b16 %v300
    %v333 = vunpack.c.l.b16 %v301
    %v334 = vunpack.c.l.b16 %v302
    %v335 = vunpack.c.l.b16 %v303
    %v336 = vunpack.c.l.b16 %v304
    %v337 = vunpack.c.l.b16 %v305
    %v338 = vunpack.c.l.b16 %v306
    %v339 = vunpack.c.l.b16 %v307
    %v340 = vunpack.c.l.b16 %v308
    %v341 = vunpack.c.l.b16 %v309
    %v342 = vunpack.c.l.b16 %v310
    %v343 = vunpack.c.l.b16 %v311
    %v344 = vunpack.c.l.b16 %v312
    %v345 = vunpack.c.l.b16 %v313
    %v346 = vpack.c.b16 %v331, %v330
    %v347 = vpack.c.b16 %v333, %v332
    %v348 = vpack.c.b16 %v335, %v334
    %v349 = vpack.c.b16 %v337, %v336
    %v350 = vpack.c.b16 %v339, %v338
    %v351 = vpack.c.b16 %v341, %v340
    %v352 = vpack.c.b16 %v343, %v342
    %v353 = vpack.c.b16 %v345, %v344
    %362 = vmatprep.subr.bf16.mxu0 0
    %363 = vmatpush1.bf16.msra.mxu0 %v346
    %364 = vmatprep.subr.bf16.mxu0 0
    %365 = vmatpush1.bf16.msra.mxu0 %v347
    %366 = vmatprep.subr.bf16.mxu0 0
    %367 = vmatpush1.bf16.msra.mxu0 %v348
    %368 = vmatprep.subr.bf16.mxu0 0
    %369 = vmatpush1.bf16.msra.mxu0 %v349
    %370 = vmatprep.subr.bf16.mxu0 0
    %371 = vmatpush1.bf16.msra.mxu0 %v350
    %372 = vmatprep.subr.bf16.mxu0 0
    %373 = vmatpush1.bf16.msra.mxu0 %v351
    %374 = vmatprep.subr.bf16.mxu0 0
    %375 = vmatpush1.bf16.msra.mxu0 %v352
    %376 = vmatprep.subr.bf16.mxu0 0
    %377 = vmatpush1.bf16.msra.mxu0 %v353
    %378 = vmatprep.subr.bf16.mxu0 0
    %379 = vmatpush1.bf16.msra.mxu0 0
    %380 = vmatprep.subr.bf16.mxu0 0
    %381 = vmatpush1.bf16.msra.mxu0 0
    %382 = vmatprep.subr.bf16.mxu0 0
    %383 = vmatpush1.bf16.msra.mxu0 0
    %384 = vmatprep.subr.bf16.mxu0 0
    %385 = vmatpush1.bf16.msra.mxu0 0
    %386 = vmatprep.subr.bf16.mxu0 0
    %387 = vmatpush1.bf16.msra.mxu0 0
    %388 = vmatprep.subr.bf16.mxu0 0
    %389 = vmatpush1.bf16.msra.mxu0 0
    %390 = vmatprep.subr.bf16.mxu0 0
    %391 = vmatpush1.bf16.msra.mxu0 0
    %392 = vmatprep.subr.bf16.mxu0 0
    %393 = vmatpush1.bf16.msra.mxu0 0
    %394 = vmatprep.mubr.bf16.mxu0 0
    %395 = vmatmul.mubr.bf16.gmra.mrb[0].mxu0 %v196
    %v396 = vpop.f32.mrb[0].mxu0
    %v397 = vadd.f32 0.0, %v396
    %v398 = vpop.f32.mrb[0].mxu0
    %v399 = vpop.f32.mrb[0].mxu0
    %v400 = vadd.f32 0.0, %v399
    %v401 = vpop.f32.mrb[0].mxu0
    %402 = vmatprep.mubr.bf16.mxu0 0
    %403 = vmatmul.mubr.bf16.gmra.mrb[0].mxu0 %v197
    %v404 = vpop.f32.mrb[0].mxu0
    %v405 = vadd.f32 0.0, %v404
    %v406 = vpop.f32.mrb[0].mxu0
    %v407 = vpop.f32.mrb[0].mxu0
    %v408 = vadd.f32 0.0, %v407
    %v409 = vpop.f32.mrb[0].mxu0
    %410 = vdwg.mxu0
    %s411 = scalar_lea.vmem [#allocation8], 128
    %v412 = vld [vmem:[%s411] sm:$0xf]
    %v413 = vld [vmem:[%s411 + $0x4] sm:$0xf]
    %v414 = vld [vmem:[%s411 + $0x8] sm:$0xf]
    %v415 = vld [vmem:[%s411 + $0xc] sm:$0xf]
    %v416 = vld [vmem:[%s411 + $0x10] sm:$0xf]
    %v417 = vld [vmem:[%s411 + $0x14] sm:$0xf]
    %v418 = vld [vmem:[%s411 + $0x18] sm:$0xf]
    %v419 = vld [vmem:[%s411 + $0x1c] sm:$0xf]
    %v420 = vld [vmem:[%s411 + $0x20] sm:$0xf]
    %v421 = vld [vmem:[%s411 + $0x24] sm:$0xf]
    %v422 = vld [vmem:[%s411 + $0x28] sm:$0xf]
    %v423 = vld [vmem:[%s411 + $0x2c] sm:$0xf]
    %v424 = vld [vmem:[%s411 + $0x30] sm:$0xf]
    %v425 = vld [vmem:[%s411 + $0x34] sm:$0xf]
    %v426 = vld [vmem:[%s411 + $0x38] sm:$0xf]
    %v427 = vld [vmem:[%s411 + $0x3c] sm:$0xf]
    %v444 = vunpack.c.l.b16 %v412
    %v445 = vunpack.c.l.b16 %v413
    %v446 = vunpack.c.l.b16 %v414
    %v447 = vunpack.c.l.b16 %v415
    %v448 = vunpack.c.l.b16 %v416
    %v449 = vunpack.c.l.b16 %v417
    %v450 = vunpack.c.l.b16 %v418
    %v451 = vunpack.c.l.b16 %v419
    %v452 = vunpack.c.l.b16 %v420
    %v453 = vunpack.c.l.b16 %v421
    %v454 = vunpack.c.l.b16 %v422
    %v455 = vunpack.c.l.b16 %v423
    %v456 = vunpack.c.l.b16 %v424
    %v457 = vunpack.c.l.b16 %v425
    %v458 = vunpack.c.l.b16 %v426
    %v459 = vunpack.c.l.b16 %v427
    %v460 = vpack.c.b16 %v445, %v444
    %v461 = vpack.c.b16 %v447, %v446
    %v462 = vpack.c.b16 %v449, %v448
    %v463 = vpack.c.b16 %v451, %v450
    %v464 = vpack.c.b16 %v453, %v452
    %v465 = vpack.c.b16 %v455, %v454
    %v466 = vpack.c.b16 %v457, %v456
    %v467 = vpack.c.b16 %v459, %v458
    %476 = vmatprep.subr.bf16.mxu0 0
    %477 = vmatpush1.bf16.msra.mxu0 %v460
    %478 = vmatprep.subr.bf16.mxu0 0
    %479 = vmatpush1.bf16.msra.mxu0 %v461
    %480 = vmatprep.subr.bf16.mxu0 0
    %481 = vmatpush1.bf16.msra.mxu0 %v462
    %482 = vmatprep.subr.bf16.mxu0 0
    %483 = vmatpush1.bf16.msra.mxu0 %v463
    %484 = vmatprep.subr.bf16.mxu0 0
    %485 = vmatpush1.bf16.msra.mxu0 %v464
    %486 = vmatprep.subr.bf16.mxu0 0
    %487 = vmatpush1.bf16.msra.mxu0 %v465
    %488 = vmatprep.subr.bf16.mxu0 0
    %489 = vmatpush1.bf16.msra.mxu0 %v466
    %490 = vmatprep.subr.bf16.mxu0 0
    %491 = vmatpush1.bf16.msra.mxu0 %v467
    %492 = vmatprep.subr.bf16.mxu0 0
    %493 = vmatpush1.bf16.msra.mxu0 0
    %494 = vmatprep.subr.bf16.mxu0 0
    %495 = vmatpush1.bf16.msra.mxu0 0
    %496 = vmatprep.subr.bf16.mxu0 0
    %497 = vmatpush1.bf16.msra.mxu0 0
    %498 = vmatprep.subr.bf16.mxu0 0
    %499 = vmatpush1.bf16.msra.mxu0 0
    %500 = vmatprep.subr.bf16.mxu0 0
    %501 = vmatpush1.bf16.msra.mxu0 0
    %502 = vmatprep.subr.bf16.mxu0 0
    %503 = vmatpush1.bf16.msra.mxu0 0
    %504 = vmatprep.subr.bf16.mxu0 0
    %505 = vmatpush1.bf16.msra.mxu0 0
    %506 = vmatprep.subr.bf16.mxu0 0
    %507 = vmatpush1.bf16.msra.mxu0 0
    %508 = vmatprep.mubr.bf16.mxu0 0
    %509 = vmatmul.mubr.bf16.gmra.mrb[0].mxu0 %v196
    %v510 = vpop.f32.mrb[0].mxu0
    %v511 = vadd.f32 0.0, %v510
    %v512 = vpop.f32.mrb[0].mxu0
    %v513 = vpop.f32.mrb[0].mxu0
    %v514 = vadd.f32 0.0, %v513
    %v515 = vpop.f32.mrb[0].mxu0
    %516 = vmatprep.mubr.bf16.mxu0 0
    %517 = vmatmul.mubr.bf16.gmra.mrb[0].mxu0 %v197
    %v518 = vpop.f32.mrb[0].mxu0
    %v519 = vadd.f32 0.0, %v518
    %v520 = vpop.f32.mrb[0].mxu0
    %v521 = vpop.f32.mrb[0].mxu0
    %v522 = vadd.f32 0.0, %v521
    %v523 = vpop.f32.mrb[0].mxu0
    %524 = vdwg.mxu0
    %vm525 = vcmp.eq.s32.totalorder %v168, 0
    %vm526 = vcmp.eq.s32.totalorder %v169, 0
    %vm527 = vcmp.eq.s32.totalorder %v170, 0
    %vm528 = vcmp.eq.s32.totalorder %v171, 0
    %vm533 = vcmask 1040384
    %v534 = vrot.slane %v283, 7
    %v535 = vrot.slane %v286, 7
    %v536 = vsel %vm533, %v534, %v535
    %v537 = vrot.slane %v291, 7
    %v538 = vsel %vm533, %v535, %v537
    %v539 = vrot.slane %v294, 7
    %v540 = vsel %vm533, %v537, %v539
    %v545 = vsel %vm533, 0.0, %v534
    %v546 = vsel %vm525, 1, 0
    %v547 = vsel %vm526, 1, 0
    %v548 = vsel %vm527, 1, 0
    %v549 = vsel %vm528, 1, 0
    %vm550 = vcmp.eq.s32.totalorder %v546, 1
    %vm551 = vcmp.eq.s32.totalorder %v547, 1
    %vm552 = vcmp.eq.s32.totalorder %v548, 1
    %vm553 = vcmp.eq.s32.totalorder %v549, 1
    %v554 = vsel %vm550, 0.0, %v545
    %v555 = vsel %vm551, 0.0, %v536
    %v556 = vsel %vm552, 0.0, %v538
    %v557 = vsel %vm553, 0.0, %v540
    %vm558 = vcmp.eq.s32.totalorder %v168, 15
    %vm559 = vcmp.eq.s32.totalorder %v169, 15
    %vm560 = vcmp.eq.s32.totalorder %v170, 15
    %vm561 = vcmp.eq.s32.totalorder %v171, 15
    %v562 = vsel %vm558, 1, 0
    %v563 = vsel %vm559, 1, 0
    %v564 = vsel %vm560, 1, 0
    %v565 = vsel %vm561, 1, 0
    %vm566 = vcmp.eq.s32.totalorder %v562, 1
    %vm567 = vcmp.eq.s32.totalorder %v563, 1
    %vm568 = vcmp.eq.s32.totalorder %v564, 1
    %vm569 = vcmp.eq.s32.totalorder %v565, 1
    %vm575 = vcmask 1046528
    %v576 = vrot.slane %v511, 1
    %v577 = vrot.slane %v514, 1
    %v578 = vsel %vm575, %v576, %v577
    %v579 = vrot.slane %v519, 1
    %v580 = vsel %vm575, %v577, %v579
    %v581 = vrot.slane %v522, 1
    %v582 = vsel %vm575, %v579, %v581
    %v583 = vrot.slane 0.0, 1
    %v584 = vsel %vm575, %v581, %v583
    %v589 = vsel %vm566, 0.0, %v578
    %v590 = vsel %vm567, 0.0, %v580
    %v591 = vsel %vm568, 0.0, %v582
    %v592 = vsel %vm569, 0.0, %v584
    %v593 = vadd.f32 %v554, %v397
    %v594 = vadd.f32 %v555, %v400
    %v595 = vadd.f32 %v556, %v405
    %v596 = vadd.f32 %v557, %v408
    %v597 = vadd.f32 %v593, %v589
    %v598 = vadd.f32 %v594, %v590
    %v599 = vadd.f32 %v595, %v591
    %v600 = vadd.f32 %v596, %v592
    %v601 = vld [vmem:[%s4] sm:$0x1]
    %v603 = vlaneseq
    %v604 = vshrl.u32 %v603, 7
    %v605 = vsub.s32 0, %v604
    %v606 = vrot.slane %v601, %v605
    %v608 = vadd.f32 %v597, %v606
    %v609 = vadd.f32 %v598, %v606
    %v610 = vadd.f32 %v599, %v606
    %v611 = vadd.f32 %v600, %v606
    %v612 = vmax.f32 %v608, 0.0
    %v613 = vmax.f32 %v609, 0.0
    %v614 = vmax.f32 %v610, 0.0
    %v615 = vmax.f32 %v611, 0.0
    %v616 = vpack.c.bf16 %v613, %v612
    %v617 = vpack.c.bf16 %v615, %v614
    %v620 = vunpack.c.l.b16 %v616
    %v621 = vunpack.c.h.b16 %v616
    %v622 = vunpack.c.l.b16 %v617
    %v623 = vunpack.c.h.b16 %v617
    %v624 = vpack.c.b16 %v620, %v620
    %v625 = vpack.c.b16 %v621, %v621
    %v626 = vpack.c.b16 %v622, %v622
    %v627 = vpack.c.b16 %v623, %v623
    %632 = vst [vmem:[#allocation10] sm:$0xf] %v624
    %633 = vst [vmem:[#allocation10 + $0x4] sm:$0xf] %v625
    %634 = vst [vmem:[#allocation10 + $0x8] sm:$0xf] %v626
    %635 = vst [vmem:[#allocation10 + $0xc] sm:$0xf] %v627
    // Predicated region
    $region38: #{_c1_step.1} parent=1 // pred_check
      _
    $region39: #{_c1_step.1} parent=1 // pred_check_branch
      %637 = sbr.rel (0) target = $region41
    $region40: #{_c1_step.1} parent=1 // pred_region
      %s639 = ssub.s32 256, 256
      %640 = vsyncadd [#allocation4], %s639
      %s641 = sshll.u32 [#allocation10], 4
      %s642 = int_to_ptr.vmem [resolvable:$true] %s641
      %647 = dma.vmem_to_hbm [thread:$0]  %s642, 256, %s5, [#allocation4], 64, 64, 4
    $region41: #{_c1_step.1} parent=1 // pred_fallthru
      _
    // Predicated region
    $region42: #{_c1_step.1} parent=1 // pred_check
      _
    $region43: #{_c1_step.1} parent=1 // pred_check_branch
      %649 = sbr.rel (0) target = $region45
    $region44: #{_c1_step.1} parent=1 // pred_region
      %650 = dma.done [#allocation4], 256
    $region45: #{_c1_step.1} parent=1 // pred_fallthru
      _
    %651 = vsyncpa [#allocation3], 1
    %652 = vsyncpa [#allocation6], 1
    %653 = vsyncpa [#allocation9], 1
    %654 = vsyncpa [#allocation4], 1

</llo_original>
